<compile_context>
chip_gen: v6e
topology: v6e:2x2x1
jax: 0.10.0
libtpu: 0.0.40
codegen_flags: <defaults>
</compile_context>

<pallas_src>
import jax
import jax.numpy as jnp
from jax.experimental import pallas as pl
from jax.experimental.pallas import tpu as pltpu


def _cam_kernel(sel_ref, f_ref, o_ref):
    """CAM forward for one block of B samples.

    sel_ref : VMEM (B, 1, C)  f32    gathered classifier rows for this block
    f_ref   : VMEM (B, C, HW)        feature block, native dtype
    o_ref   : VMEM (B, C, HW)        output block, native dtype
    """
    # heat[b, 0, l] = sum_c sel[b, 0, c] * feat[b, c, l]
    # Native-dtype contraction (MXU, f32 accumulation): no f32 copy of the
    # feature block and no (B, C, HW) broadcast-product temporary.
    heat = jnp.einsum(
        'boc,bcl->bol',
        sel_ref[...].astype(f_ref.dtype),          # tiny (B,1,C) cast, no-op for f32
        f_ref[...],
        preferred_element_type=jnp.float32,
    )                                              # (B, 1, HW) f32

    h_min = jnp.min(heat, axis=-1, keepdims=True)  # (B, 1, 1)
    h_max = jnp.max(heat, axis=-1, keepdims=True)  # (B, 1, 1)
    # Exact division: only B*HW values, fully hidden under the HBM DMA and it
    # keeps results bit-consistent with the reference.
    heat_n = (heat - h_min) / (h_max - h_min + jnp.float32(1e-6))

    # Re-read the feature block from VMEM for the final scale (VMEM re-reads
    # are cheap: 3 vld slots/cycle) instead of keeping a long-lived copy
    # across the reduction.  The multiply is done in f32 (safe on v5e, which
    # has no bf16 VALU) and fuses with the store-time cast.
    o_ref[...] = (f_ref[...].astype(jnp.float32) * heat_n).astype(o_ref.dtype)


def _vmem_budgets():
    """Returns (physical_vmem, vmem_limit_bytes, block_budget_bytes)."""
    cap = 64 * 1024 * 1024                           # conservative default (v7x per-TC)
    try:
        info = pltpu.get_tpu_info()
        cap = int(getattr(info, "vmem_capacity_bytes", cap) or cap)
    except Exception:
        pass
    if cap >= 100 * 1024 * 1024:                     # v5e / v6e: 128 MiB physical VMEM
        return cap, 96 * 1024 * 1024, 80 * 1024 * 1024
    return cap, 48 * 1024 * 1024, 36 * 1024 * 1024   # v7x: 64 MiB physical VMEM


def _pick_block_batch(n, per_sample_bytes, budget_bytes):
    """Largest divisor of n whose block fits the VMEM budget; among those,
    prefer sizes that give an even number of grid steps so the 'parallel'
    grid axis balances across v7x's two TensorCores."""
    max_b = max(1, int(budget_bytes // max(per_sample_bytes, 1)))
    divisors = [b for b in range(1, n + 1) if n % b == 0 and b <= max_b]
    if not divisors:
        return 1
    even_grid = [b for b in divisors if (n // b) % 2 == 0]
    pool = even_grid if even_grid else divisors
    return max(pool)


def cam_forward(features_map, pids, classifier_weight):
    """features_map: (N, C, H, W); pids: (N,) int; classifier_weight: (NUM_CLASSES, C)."""
    n, c, h, w = features_map.shape
    hw = h * w
    out_dtype = features_map.dtype

    # Wrapper-side gather of the classifier rows (the XLA gather costs only
    # N*C*4 bytes of HBM).  Reshaped to (N, 1, C) so the per-block BlockSpec's
    # last two dims equal the full array dims (no (8,128) tiling constraint on
    # the batch-block dim).
    sel = jnp.take(classifier_weight, pids.astype(jnp.int32), axis=0)
    sel = sel.astype(jnp.float32).reshape(n, 1, c)

    # Features stream through HBM in their native dtype (bf16 halves traffic);
    # output keeps the feature dtype.
    feat_flat = features_map.reshape(n, c, hw)

    # Generation-specific VMEM budgets.
    cap, vmem_limit, block_budget = _vmem_budgets()

    # (8,128)-padding-aware per-sample footprint: double-buffered in + out
    # feature blocks, small f32 heat temporaries, and the tiny sel block.
    feat_isz = jnp.dtype(features_map.dtype).itemsize
    out_isz = jnp.dtype(out_dtype).itemsize
    hw_pad = ((hw + 127) // 128) * 128               # lane padding (last dim)
    c_pad = ((c + 7) // 8) * 8                       # sublane padding
    per_sample = c_pad * hw_pad * 2 * (feat_isz + out_isz)
    per_sample += 4 * hw_pad * 4                     # heat / heat_n temporaries
    per_sample += 2 * 8 * ((c + 127) // 128) * 128 * 4   # sel block (double-buffered)

    bb = _pick_block_batch(n, per_sample, block_budget)
    need = bb * per_sample + (2 << 20)
    if need > vmem_limit:                            # e.g. huge single sample
        vmem_limit = min(need, cap - (8 << 20))
    grid = (n // bb,)

    out_flat = pl.pallas_call(
        _cam_kernel,
        out_shape=jax.ShapeDtypeStruct((n, c, hw), out_dtype),
        grid_spec=pltpu.PrefetchScalarGridSpec(
            num_scalar_prefetch=0,
            grid=grid,
            in_specs=[
                pl.BlockSpec((bb, 1, c), lambda i: (i, 0, 0)),
                pl.BlockSpec((bb, c, hw), lambda i: (i, 0, 0)),
            ],
            out_specs=pl.BlockSpec((bb, c, hw), lambda i: (i, 0, 0)),
        ),
        compiler_params=pltpu.CompilerParams(
            dimension_semantics=("parallel",),
            vmem_limit_bytes=int(vmem_limit),
        ),
    )(sel, feat_flat)

    # TODO(synk): if production H*W (e.g. 49, 196) is not a multiple of 128,
    # an (N, HW, C) feature layout (C on the lane axis) avoids masked partial
    # stores; that layout change belongs to the feature producer, so NCHW is
    # kept here (block sizing above already accounts for the lane padding).
    return out_flat.reshape(n, c, h, w)


def cam_reference(features_map, pids, classifier_weight):
    """Pure-JAX reference mirroring the PyTorch module."""
    n, c, h, w = features_map.shape
    sel = classifier_weight[pids].astype(jnp.float32)              # (N, C)
    flat = features_map.reshape(n, c, h * w).astype(jnp.float32)
    heat = jnp.einsum('nc,ncl->nl', sel, flat)                     # (N, HW)
    hmin = heat.min(axis=1, keepdims=True)
    hmax = heat.max(axis=1, keepdims=True)
    heat = (heat - hmin) / (hmax - hmin + 1e-6)
    out = flat * heat[:, None, :]
    return out.reshape(n, c, h, w).astype(features_map.dtype)


if __name__ == "__main__":
    key = jax.random.PRNGKey(0)
    k1, k2, k3 = jax.random.split(key, 3)

    N, C, H, W = 2, 4, 16, 16
    NUM_CLASSES = 8

    features_map = jax.random.normal(k1, (N, C, H, W), dtype=jnp.float32)
    # deterministic synthetic classifier weight (last param of a bias-free Linear)
    classifier_weight = jax.random.normal(k2, (NUM_CLASSES, C), dtype=jnp.float32)
    pids = jax.random.randint(k3, (N,), 0, NUM_CLASSES, dtype=jnp.int32)

    out = cam_forward(features_map, pids, classifier_weight)
    out = jax.block_until_ready(out)

    ref = cam_reference(features_map, pids, classifier_weight)
    assert out.shape == (N, C, H, W)
    # tolerance covers the MXU's default-precision f32 matmul passes
    assert jnp.allclose(out, ref, atol=2e-3, rtol=2e-3), "mismatch vs reference"

    print("KERNEL_OK")
</pallas_src>

<mosaic_0001>
module attributes {stable_mosaic.version = 11 : i64} {
  func.func @_cam_kernel(%arg0: i32, %arg1: memref<1x1x4xf32, #tpu.memory_space<vmem>>, %arg2: memref<1x4x256xf32, #tpu.memory_space<vmem>>, %arg3: memref<1x4x256xf32, #tpu.memory_space<vmem>>) attributes {dimension_semantics = [#tpu.dimension_semantics<parallel>], iteration_bounds = array<i64: 2>, scalar_prefetch = 0 : i64, scratch_operands = 0 : i64, tpu.core_type = #tpu.core_type<tc>, window_params = [{transform_indices = @transform_0, window_bounds = array<i64: 1, 1, 4>}, {transform_indices = @transform_1, window_bounds = array<i64: 1, 4, 256>}, {transform_indices = @transform_2, window_bounds = array<i64: 1, 4, 256>}]} {
    %c0 = arith.constant 0 : index
    %c0_0 = arith.constant 0 : index
    %c0_1 = arith.constant 0 : index
    %0 = vector.load %arg1[%c0, %c0_0, %c0_1] : memref<1x1x4xf32, #tpu.memory_space<vmem>>, vector<1x1x4xf32>
    %c0_2 = arith.constant 0 : index
    %c0_3 = arith.constant 0 : index
    %c0_4 = arith.constant 0 : index
    %1 = vector.load %arg2[%c0_2, %c0_3, %c0_4] : memref<1x4x256xf32, #tpu.memory_space<vmem>>, vector<1x4x256xf32>
    "tpu.trace_start"() <{level = 10 : i32, message = "boc,bcl->bol"}> : () -> ()
    %cst = arith.constant dense<0.000000e+00> : vector<1x1x256xf32>
    %2 = tpu.matmul %0, %1, %cst {dimension_numbers = #tpu.dot_dimension_numbers<[2], [1], [1], [2], [0, 0, 0, 1, 1, 2], [0], [0]>} : vector<1x1x4xf32>, vector<1x4x256xf32>, vector<1x1x256xf32> -> vector<1x1x256xf32>
    "tpu.trace_stop"() : () -> ()
    %cst_5 = arith.constant dense<0x7F800000> : vector<1x1xf32>
    %3 = vector.multi_reduction <minimumf>, %2, %cst_5 [2] : vector<1x1x256xf32> to vector<1x1xf32>
    %4 = vector.shape_cast %3 : vector<1x1xf32> to vector<1x1x1xf32>
    %cst_6 = arith.constant dense<0xFF800000> : vector<1x1xf32>
    %5 = vector.multi_reduction <maximumf>, %2, %cst_6 [2] : vector<1x1x256xf32> to vector<1x1xf32>
    %6 = vector.shape_cast %5 : vector<1x1xf32> to vector<1x1x1xf32>
    %7 = vector.broadcast %4 : vector<1x1x1xf32> to vector<1x1x256xf32>
    %8 = arith.subf %2, %7 : vector<1x1x256xf32>
    %9 = arith.subf %6, %4 : vector<1x1x1xf32>
    %cst_7 = arith.constant 9.99999997E-7 : f32
    %10 = vector.broadcast %cst_7 : f32 to vector<1x1x1xf32>
    %11 = arith.addf %9, %10 : vector<1x1x1xf32>
    %12 = vector.broadcast %11 : vector<1x1x1xf32> to vector<1x1x256xf32>
    %13 = arith.divf %8, %12 : vector<1x1x256xf32>
    %c0_8 = arith.constant 0 : index
    %c0_9 = arith.constant 0 : index
    %c0_10 = arith.constant 0 : index
    %14 = vector.load %arg2[%c0_8, %c0_9, %c0_10] : memref<1x4x256xf32, #tpu.memory_space<vmem>>, vector<1x4x256xf32>
    %15 = vector.broadcast %13 : vector<1x1x256xf32> to vector<1x4x256xf32>
    %16 = arith.mulf %14, %15 : vector<1x4x256xf32>
    %c0_11 = arith.constant 0 : index
    %c0_12 = arith.constant 0 : index
    %c0_13 = arith.constant 0 : index
    %17 = vector.load %arg3[%c0_11, %c0_12, %c0_13] : memref<1x4x256xf32, #tpu.memory_space<vmem>>, vector<1x4x256xf32>
    tpu.vector_store %arg3[%c0_11, %c0_12, %c0_13], %16 {strides = array<i32>} : memref<1x4x256xf32, #tpu.memory_space<vmem>>, vector<1x4x256xf32>,
    return
  }
  func.func @transform_0(%arg0: i32) -> (i32, i32, i32) {
    %c0_i32 = arith.constant 0 : i32
    %c0_i32_0 = arith.constant 0 : i32
    %c0_i32_1 = arith.constant 0 : i32
    return %arg0, %c0_i32, %c0_i32_0 : i32, i32, i32
  }
  func.func @transform_1(%arg0: i32) -> (i32, i32, i32) {
    %c0_i32 = arith.constant 0 : i32
    %c0_i32_0 = arith.constant 0 : i32
    %c0_i32_1 = arith.constant 0 : i32
    return %arg0, %c0_i32, %c0_i32_0 : i32, i32, i32
  }
  func.func @transform_2(%arg0: i32) -> (i32, i32, i32) {
    %c0_i32 = arith.constant 0 : i32
    %c0_i32_0 = arith.constant 0 : i32
    %c0_i32_1 = arith.constant 0 : i32
    return %arg0, %c0_i32, %c0_i32_0 : i32, i32, i32
  }
}

</mosaic_0001>

<llo_original>
// kernel: tpu_custom_call.1
$region0: #{tpu_custom_call.1}
  #allocation0 [shape = 'u32[]', space=smem, size = 0x4, offset = 0x4, fixed_abs, tag = 'smem constant byte address 0x4 - core index']
  #allocation1 [shape = 'u32[144,128]{1,0:T(1,128)}', space=vmem, size = 0x12000, scoped, tag = 'internal scratch']
  %s0 = inlined_call_operand.hbm [shape: f32[2,1,4], index: 0, kind: input, shape index: {}]
  %s1 = inlined_call_operand.hbm [shape: f32[2,4,256], index: 1, kind: input, shape index: {}]
  %s2 = inlined_call_operand.hbm [shape: f32[2,4,256], index: 2, kind: output, shape index: {}]
  %s3 = sld [smem:[#allocation0]]
  $region49: #{tpu_custom_call.1} parent=0
    _
  %s5 = ssub.s32 1, %s3
  %s6 = scalar_select 0, %s5, %s3
  $region1: #{tpu_custom_call.1} parent=0
    #allocation2 [shape = 'u8[1024]{0}', space=vmem, size = 0x400, scoped, tag = 'input window, operand 0']
    #allocation3 [shape = 's32[2]{0}', space=sflag, size = 0x8, scoped, tag = 'scoped memory for tpu_custom_call.1']
    #allocation4 [shape = 's32[2]{0}', space=sflag, size = 0x8, scoped, tag = 'scoped memory for tpu_custom_call.1']
    #allocation5 [shape = 'u8[8192]{0}', space=vmem, size = 0x2000, scoped, tag = 'input window, operand 1']
    #allocation6 [shape = 's32[2]{0}', space=sflag, size = 0x8, scoped, tag = 'scoped memory for tpu_custom_call.1']
    #allocation7 [shape = 'u8[8192]{0}', space=vmem, size = 0x2000, scoped, tag = 'output window, operand 0']
    %7 = vsyncpa [#allocation3], 0
    %s8 = scalar_lea.sflag [#allocation3], 1
    %9 = vsyncpa %s8, 0
    %10 = vsyncpa [#allocation6], 0
    %s11 = scalar_lea.sflag [#allocation6], 1
    %12 = vsyncpa %s11, 0
    %13 = vsyncpa [#allocation4], 0
    %s14 = scalar_lea.sflag [#allocation4], 1
    %15 = vsyncpa %s14, 0
    loop: start=0, step=1, limit=4
    $region2: #{tpu_custom_call.1} parent=1 // loop_pre_header
      _
    $region3: #{tpu_custom_call.1} parent=1 // loop_header
      %s17 = sphi 0, %s21
      %p18 = scmp.ge.s32.totalorder %s17, 4
      %s27 = sphi 0, %s29
      %s30 = sphi 0, %s27
      %s31 = sphi 0, %s30
      %s47 = sphi 0, %s31
      %s53 = sphi 0, %s55
      %s56 = sphi 0, %s53
      %s57 = sphi 0, %s56
      %s73 = sphi 0, %s57
      %s79 = sphi 0, %s81
      %s82 = sphi 0, %s79
      %s83 = sphi 0, %s82
      %s99 = sphi 0, %s83
    $region4: #{tpu_custom_call.1} parent=1 // loop_header_branch
      %20 = sbr.rel (%p18) target = $region8
    $region5: #{tpu_custom_call.1} parent=1 // loop_body
      %s22 = ssub.s32 %s17, 1
      %s23 = ssub.s32 %s17, 2
      %s24 = sadd.s32 %s17, 1
      %s25 = ssub.s32 %s17, %s24
      %p26 = scmp.eq.s32.totalorder %s25, 0
      %s28 = sadd.s32 %s27, 1
      %s29 = scalar_select %p26, %s27, %s28
      %p32 = pneg %p26
      %p33 = scmp.eq.s32.totalorder %s17, 1
      %p34 = por %p32, %p33
      %p35 = scmp.ne.s32.totalorder %s27, %s30
      %p36 = scmp.eq.s32.totalorder %s17, 0
      %p37 = por %p35, %p36
      %p38 = scmp.ne.s32.totalorder %s27, %s30
      %p39 = scmp.eq.s32.totalorder %s22, 1
      %p40 = por %p38, %p39
      %p41 = scmp.ne.s32.totalorder %s30, %s31
      %p42 = scmp.eq.s32.totalorder %s22, 0
      %p43 = por %p41, %p42
      %p44 = scmp.ne.s32.totalorder %s30, %s31
      %p45 = scmp.eq.s32.totalorder %s23, 1
      %p46 = por %p44, %p45
      %p48 = scmp.ne.s32.totalorder %s31, %s47
      %p49 = scmp.eq.s32.totalorder %s23, 0
      %p50 = por %p48, %p49
      %s51 = ssub.s32 %s17, %s24
      %p52 = scmp.eq.s32.totalorder %s51, 0
      %s54 = sadd.s32 %s53, 1
      %s55 = scalar_select %p52, %s53, %s54
      %p58 = pneg %p52
      %p59 = scmp.eq.s32.totalorder %s17, 1
      %p60 = por %p58, %p59
      %p61 = scmp.ne.s32.totalorder %s53, %s56
      %p62 = scmp.eq.s32.totalorder %s17, 0
      %p63 = por %p61, %p62
      %p64 = scmp.ne.s32.totalorder %s53, %s56
      %p65 = scmp.eq.s32.totalorder %s22, 1
      %p66 = por %p64, %p65
      %p67 = scmp.ne.s32.totalorder %s56, %s57
      %p68 = scmp.eq.s32.totalorder %s22, 0
      %p69 = por %p67, %p68
      %p70 = scmp.ne.s32.totalorder %s56, %s57
      %p71 = scmp.eq.s32.totalorder %s23, 1
      %p72 = por %p70, %p71
      %p74 = scmp.ne.s32.totalorder %s57, %s73
      %p75 = scmp.eq.s32.totalorder %s23, 0
      %p76 = por %p74, %p75
      %s77 = ssub.s32 %s17, %s24
      %p78 = scmp.eq.s32.totalorder %s77, 0
      %s80 = sadd.s32 %s79, 1
      %s81 = scalar_select %p78, %s79, %s80
      %p84 = pneg %p78
      %p85 = scmp.eq.s32.totalorder %s17, 1
      %p86 = por %p84, %p85
      %p87 = scmp.ne.s32.totalorder %s79, %s82
      %p88 = scmp.eq.s32.totalorder %s17, 0
      %p89 = por %p87, %p88
      %p90 = scmp.ne.s32.totalorder %s79, %s82
      %p91 = scmp.eq.s32.totalorder %s22, 1
      %p92 = por %p90, %p91
      %p93 = scmp.ne.s32.totalorder %s82, %s83
      %p94 = scmp.eq.s32.totalorder %s22, 0
      %p95 = por %p93, %p94
      %p96 = scmp.ne.s32.totalorder %s82, %s83
      %p97 = scmp.eq.s32.totalorder %s23, 1
      %p98 = por %p96, %p97
      %p100 = scmp.ne.s32.totalorder %s83, %s99
      %p101 = scmp.eq.s32.totalorder %s23, 0
      %p102 = por %p100, %p101
      %p103 = scmp.le.s32.totalorder 1, %s17
      %p104 = scmp.lt.s32.totalorder %s17, 3
      %p105 = pnand %p103, %p104
      %p106 = pneg %p105
      // Predicated region
      $region9: #{tpu_custom_call.1} parent=5 // pred_check
        _
      $region10: #{tpu_custom_call.1} parent=5 // pred_check_branch
        %108 = sbr.rel (%p105) target = $region12
      $region11: #{tpu_custom_call.1} parent=5 // pred_region
        %s109 = ssub.s32 %s17, 1
      $region12: #{tpu_custom_call.1} parent=5 // pred_fallthru
        _
      %p110 = scmp.lt.s32.totalorder %s17, 2
      // Predicated region
      $region13: #{tpu_custom_call.1} parent=5 // pred_check
        %p111 = pneg %p110
      $region14: #{tpu_custom_call.1} parent=5 // pred_check_branch
        %113 = sbr.rel (%p111) target = $region16
      $region15: #{tpu_custom_call.1} parent=5 // pred_region
        // Predicated region
        $region17: #{tpu_custom_call.1} parent=15 // pred_check
          %p114 = pneg %p37
        $region18: #{tpu_custom_call.1} parent=15 // pred_check_branch
          %116 = sbr.rel (%p114) target = $region20
        $region19: #{tpu_custom_call.1} parent=15 // pred_region
          %s117 = sand.u32 %s27, 1
          %s118 = scalar_lea.sflag [#allocation3], %s117
          %s119 = sand.u32 %s27, 1
          %s120 = scalar_lea.vmem [#allocation2], %s119
          %s122 = ssub.s32 16, 16
          %123 = vsyncadd %s118, %s122
          %s124 = smul.addr %s17, 16
          %s125 = scalar_lea.hbm %s0, %s124
          %s127 = sshll.u32 %s120, 4
          %s128 = int_to_ptr.vmem [resolvable:$true] %s127
          %130 = dma.hbm_to_vmem [thread:$0]  %s125, 16, %s128, %s118
        $region20: #{tpu_custom_call.1} parent=15 // pred_fallthru
          _
        // Predicated region
        $region21: #{tpu_custom_call.1} parent=15 // pred_check
          %p131 = pneg %p63
        $region22: #{tpu_custom_call.1} parent=15 // pred_check_branch
          %133 = sbr.rel (%p131) target = $region24
        $region23: #{tpu_custom_call.1} parent=15 // pred_region
          %s134 = sand.u32 %s53, 1
          %s135 = scalar_lea.sflag [#allocation6], %s134
          %s136 = sand.u32 %s53, 1
          %s137 = smul.addr %s136, 8
          %s138 = scalar_lea.vmem [#allocation5], %s137
          %s140 = ssub.s32 128, 128
          %141 = vsyncadd %s135, %s140
          %s142 = smul.addr %s17, 2
          %s143 = smul.addr %s142, 64
          %s144 = scalar_lea.hbm %s1, %s143
          %s146 = sshll.u32 %s138, 4
          %s147 = int_to_ptr.vmem [resolvable:$true] %s146
          %149 = dma.hbm_to_vmem [thread:$0]  %s144, 128, %s147, %s135
        $region24: #{tpu_custom_call.1} parent=15 // pred_fallthru
          _
      $region16: #{tpu_custom_call.1} parent=5 // pred_fallthru
        _
      %p150 = scmp.le.s32.totalorder 1, %s17
      %p151 = scmp.lt.s32.totalorder %s17, 3
      %p152 = pnand %p150, %p151
      %p153 = pneg %p152
      // Predicated region
      $region25: #{tpu_custom_call.1} parent=5 // pred_check
        _
      $region26: #{tpu_custom_call.1} parent=5 // pred_check_branch
        %155 = sbr.rel (%p152) target = $region28
      $region27: #{tpu_custom_call.1} parent=5 // pred_region
        %s156 = ssub.s32 %s17, 1
        %s157 = sand.u32 %s30, 1
        %s158 = scalar_lea.sflag [#allocation3], %s157
        %s159 = sand.u32 %s30, 1
        %s160 = scalar_lea.vmem [#allocation2], %s159
        // Predicated region
        $region29: #{tpu_custom_call.1} parent=27 // pred_check
          %p161 = pneg %p43
        $region30: #{tpu_custom_call.1} parent=27 // pred_check_branch
          %163 = sbr.rel (%p161) target = $region32
        $region31: #{tpu_custom_call.1} parent=27 // pred_region
          %164 = dma.done %s158, 16
        $region32: #{tpu_custom_call.1} parent=27 // pred_fallthru
          _
        %s165 = sand.u32 %s56, 1
        %s166 = scalar_lea.sflag [#allocation6], %s165
        %s167 = sand.u32 %s56, 1
        %s168 = smul.addr %s167, 8
        %s169 = scalar_lea.vmem [#allocation5], %s168
        // Predicated region
        $region33: #{tpu_custom_call.1} parent=27 // pred_check
          %p170 = pneg %p69
        $region34: #{tpu_custom_call.1} parent=27 // pred_check_branch
          %172 = sbr.rel (%p170) target = $region36
        $region35: #{tpu_custom_call.1} parent=27 // pred_region
          %173 = dma.done %s166, 128
        $region36: #{tpu_custom_call.1} parent=27 // pred_fallthru
          _
        %s174 = sand.u32 %s30, 1
        %s175 = scalar_lea.sflag [#allocation3], %s174
        %s176 = sand.u32 %s30, 1
        %s177 = scalar_lea.vmem [#allocation2], %s176
        %p178 = pneg %p43
        %p179 = pneg %p40
        %s180 = sand.u32 %s56, 1
        %s181 = scalar_lea.sflag [#allocation6], %s180
        %s182 = sand.u32 %s56, 1
        %s183 = smul.addr %s182, 8
        %s184 = scalar_lea.vmem [#allocation5], %s183
        %p185 = pneg %p69
        %p186 = pneg %p66
        %p187 = pneg %p95
        %p188 = pneg %p92
        %s189 = sand.u32 %s82, 1
        %s190 = scalar_lea.sflag [#allocation4], %s189
        %s191 = sand.u32 %s82, 1
        %s192 = smul.addr %s191, 8
        %s193 = scalar_lea.vmem [#allocation7], %s192
        %v194 = vld [vmem:[%s160] sm:$0x1]
        %v195 = vld [vmem:[%s169] sm:$0xff]
        %v197 = vcombine.high %v195, %v195
        %vm198 = vcmask 31744
        %v200 = vsel %vm198, %v194, 0
        %vm202 = vcmask 1043456
        %v203 = vsel %vm202, %v195, 0
        %v205 = vsel %vm202, %v197, 0
        %207 = vmatprep.subr.mxu0 0.0
        %208 = vmatpush1.msra.mxu0 0.0
        %209 = vmatprep.subr.mxu0 0.0
        %210 = vmatpush1.msra.mxu0 0.0
        %211 = vmatprep.subr.mxu0 0.0
        %212 = vmatpush1.msra.mxu0 0.0
        %213 = vmatprep.subr.mxu0 0.0
        %214 = vmatpush1.msra.mxu0 0.0
        %215 = vmatprep.subr.mxu0 0.0
        %216 = vmatpush1.msra.mxu0 0.0
        %217 = vmatprep.subr.mxu0 0.0
        %218 = vmatpush1.msra.mxu0 0.0
        %219 = vmatprep.subr.mxu0 0.0
        %220 = vmatpush1.msra.mxu0 0.0
        %221 = vmatprep.subr.mxu0 0.0
        %222 = vmatpush1.msra.mxu0 0.0
        %223 = vmatprep.subr.mxu0 0.0
        %224 = vmatpush1.msra.mxu0 0.0
        %225 = vmatprep.subr.mxu0 0.0
        %226 = vmatpush1.msra.mxu0 0.0
        %227 = vmatprep.subr.mxu0 0.0
        %228 = vmatpush1.msra.mxu0 0.0
        %229 = vmatprep.subr.mxu0 0.0
        %230 = vmatpush1.msra.mxu0 0.0
        %231 = vmatprep.subr.mxu0 0.0
        %232 = vmatpush1.msra.mxu0 0.0
        %233 = vmatprep.subr.mxu0 0.0
        %234 = vmatpush1.msra.mxu0 0.0
        %235 = vmatprep.subr.mxu0 0.0
        %236 = vmatpush1.msra.mxu0 0.0
        %237 = vmatprep.subr.mxu0 %v205
        %238 = vmatpush1.msra.mxu0 %v203
        %239 = vmatprep.subr.mxu0 0.0
        %240 = vmatpush2.msra.mxu0 0.0
        %241 = vmatprep.subr.mxu0 0.0
        %242 = vmatpush2.msra.mxu0 0.0
        %243 = vmatprep.subr.mxu0 0.0
        %244 = vmatpush2.msra.mxu0 0.0
        %245 = vmatprep.subr.mxu0 0.0
        %246 = vmatpush2.msra.mxu0 0.0
        %247 = vmatprep.subr.mxu0 0.0
        %248 = vmatpush2.msra.mxu0 0.0
        %249 = vmatprep.subr.mxu0 0.0
        %250 = vmatpush2.msra.mxu0 0.0
        %251 = vmatprep.subr.mxu0 0.0
        %252 = vmatpush2.msra.mxu0 0.0
        %253 = vmatprep.subr.mxu0 0.0
        %254 = vmatpush2.msra.mxu0 0.0
        %255 = vmatprep.subr.mxu0 0.0
        %256 = vmatpush2.msra.mxu0 0.0
        %257 = vmatprep.subr.mxu0 0.0
        %258 = vmatpush2.msra.mxu0 0.0
        %259 = vmatprep.subr.mxu0 0.0
        %260 = vmatpush2.msra.mxu0 0.0
        %261 = vmatprep.subr.mxu0 0.0
        %262 = vmatpush2.msra.mxu0 0.0
        %263 = vmatprep.subr.mxu0 0.0
        %264 = vmatpush2.msra.mxu0 0.0
        %265 = vmatprep.subr.mxu0 0.0
        %266 = vmatpush2.msra.mxu0 0.0
        %267 = vmatprep.subr.mxu0 0.0
        %268 = vmatpush2.msra.mxu0 0.0
        %269 = vmatprep.subr.mxu0 0.0
        %270 = vmatpush2.msra.mxu0 0.0
        %271 = vmatprep.mubr.f32.mxu0 0.0
        %272 = vmatmul.mubr.f32.gmra.mxu0 %v200
        %v273 = vpop.f32.mrf.mxu0
        %v274 = vadd.f32 0.0, %v273
        %v275 = vpop.f32.mrf.mxu0
        %v276 = vadd.f32 0.0, %v275
        %277 = vdwg.mxu0
        %vm278 = vcmask 1040384
        %v279 = vsel %vm278, %v274, inf
        %v280 = vsel %vm278, %v276, inf
        %v281 = vmin.f32 %v279, %v280
        %282 = vmin.xlane.f32.xlu0 %v281
        %v283 = vpop.xlane.xlu0 %282
        %v284 = vsel %vm278, %v274, -inf
        %v285 = vsel %vm278, %v276, -inf
        %v286 = vmax.f32 %v284, %v285
        %287 = vmax.xlane.f32.xlu0 %v286
        %v288 = vpop.xlane.xlu0 %287
        %v289 = vsub.f32 %v274, %v283
        %v290 = vsub.f32 %v276, %v283
        %v291 = vsub.f32 %v288, %v283
        %v292 = vadd.f32 %v291, 1e-06
        %v293 = vrcp.pop %v292
        %v294 = vmul.f32 %v289, %v293
        %v295 = vmul.f32 %v290, %v293
        %v296 = vld [vmem:[%s169] sm:$0xff]
        %v297 = vlaneseq
        %v298 = vshrl.u32 %v297, 7
        %v299 = vsub.s32 0, %v298
        %v300 = vrot.slane %v294, %v299
        %v301 = vlaneseq
        %v302 = vshrl.u32 %v301, 7
        %v303 = vsub.s32 0, %v302
        %v304 = vrot.slane %v295, %v303
        %v307 = vcombine.low %v300, %v304
        %v309 = vmul.f32 %v296, %v307
        %310 = vst [vmem:[%s193] sm:$0xff] %v309
        %s311 = sand.u32 %s82, 1
        %s312 = scalar_lea.sflag [#allocation4], %s311
        %s313 = sand.u32 %s82, 1
        %s314 = smul.addr %s313, 8
        %s315 = scalar_lea.vmem [#allocation7], %s314
        // Predicated region
        $region37: #{tpu_custom_call.1} parent=27 // pred_check
          %p316 = pneg %p92
        $region38: #{tpu_custom_call.1} parent=27 // pred_check_branch
          %318 = sbr.rel (%p316) target = $region40
        $region39: #{tpu_custom_call.1} parent=27 // pred_region
          %s320 = ssub.s32 128, 128
          %321 = vsyncadd %s312, %s320
          %s322 = smul.addr %s22, 2
          %s323 = smul.addr %s322, 64
          %s324 = scalar_lea.hbm %s2, %s323
          %s326 = sshll.u32 %s315, 4
          %s327 = int_to_ptr.vmem [resolvable:$true] %s326
          %329 = dma.vmem_to_hbm [thread:$0]  %s327, 128, %s324, %s312
        $region40: #{tpu_custom_call.1} parent=27 // pred_fallthru
          _
      $region28: #{tpu_custom_call.1} parent=5 // pred_fallthru
        _
      %p330 = scmp.le.s32.totalorder 2, %s17
      // Predicated region
      $region41: #{tpu_custom_call.1} parent=5 // pred_check
        %p331 = pneg %p330
      $region42: #{tpu_custom_call.1} parent=5 // pred_check_branch
        %333 = sbr.rel (%p331) target = $region44
      $region43: #{tpu_custom_call.1} parent=5 // pred_region
        %s334 = ssub.s32 %s17, 2
        // Predicated region
        $region45: #{tpu_custom_call.1} parent=43 // pred_check
          %p335 = pneg %p98
        $region46: #{tpu_custom_call.1} parent=43 // pred_check_branch
          %337 = sbr.rel (%p335) target = $region48
        $region47: #{tpu_custom_call.1} parent=43 // pred_region
          %s338 = sand.u32 %s83, 1
          %s339 = scalar_lea.sflag [#allocation4], %s338
          %s340 = sand.u32 %s83, 1
          %s341 = smul.addr %s340, 8
          %s342 = scalar_lea.vmem [#allocation7], %s341
          %343 = dma.done %s339, 128
        $region48: #{tpu_custom_call.1} parent=43 // pred_fallthru
          _
      $region44: #{tpu_custom_call.1} parent=5 // pred_fallthru
        _
    $region6: #{tpu_custom_call.1} parent=1 // loop_footer
      %s21 = sadd.s32 1, %s17
    $region7: #{tpu_custom_call.1} parent=1 // loop_footer_branch
      %16 = sbr.rel target = $region3
    $region8: #{tpu_custom_call.1} parent=1 // loop_exit
      _
    %344 = vsyncpa [#allocation3], 1
    %s345 = scalar_lea.sflag [#allocation3], 1
    %346 = vsyncpa %s345, 1
    %347 = vsyncpa [#allocation6], 1
    %s348 = scalar_lea.sflag [#allocation6], 1
    %349 = vsyncpa %s348, 1
    %350 = vsyncpa [#allocation4], 1
    %s351 = scalar_lea.sflag [#allocation4], 1
    %352 = vsyncpa %s351, 1

</llo_original>
